<compile_context>
chip_gen: v7x
topology: tpu7x:2x2x1
jax: 0.10.0
libtpu: 0.0.40
codegen_flags: <defaults>
</compile_context>

<pallas_src>
import math

import jax
import jax.numpy as jnp
from jax.experimental import pallas as pl
from jax.experimental.pallas import tpu as pltpu

_MIB = 1024 * 1024


def _sublane(itemsize):
    # Sublane packing multiple per dtype width (f32 / bf16 / int8-fp8).
    return {4: 8, 2: 16, 1: 32}.get(itemsize, 8)


def _round_down(x, m):
    return (x // m) * m


def _vmem_capacity_bytes():
    try:
        return int(pltpu.get_tpu_info().vmem_capacity_bytes)
    except Exception:
        return 64 * _MIB  # v7x per-core size: conservative default for all gens


def _mul_kernel(x_ref, m_ref, o_ref):
    # Elementwise multiply.  Flat path: both blocks are (bB, L).
    # 3-D path: mask block (bB, 1, C) broadcasts over the time axis.
    o_ref[...] = x_ref[...] * m_ref[...]


def _flat_tiles(B, TC, C, itemsize, budget):
    """(bB, L) block for the flattened (B, T*C) view.

    L is a multiple of lcm(C, 128) (lane-dense AND an exact number of channel
    periods) or the full row T*C; bB is a multiple of the dtype sublane pack or
    the full batch.  cdiv grids handle any remainder.
    """
    sub = _sublane(itemsize)
    unit = (C * 128) // math.gcd(C, 128)          # lane granule
    total_bytes = B * TC * itemsize

    if TC <= unit:
        L = TC                                    # full row: always legal
    else:
        L = _round_down(TC, unit)
        # For large arrays keep >= ~8 lane steps: amortizes the replicated
        # mask (<= ~1/8 extra traffic) and feeds the pipeline / both v7x cores.
        if TC >= 8 * unit and total_bytes >= 16 * _MIB:
            L = min(L, max(unit, _round_down(TC // 8, unit)))

    # Batch block: as big as the budget allows (bigger bB -> smaller L for the
    # same block bytes -> smaller replicated mask).
    bB_raw = max(1, budget // max(1, L * itemsize))
    if bB_raw >= B:
        bB = B
    else:
        bB = max(_round_down(bB_raw, sub), min(B, 8))
    # Respect the budget even at the minimum batch block (small B, huge rows).
    if bB * L * itemsize > budget and L > unit:
        L = max(unit, _round_down(budget // (bB * itemsize), unit))
    # Expose a few grid steps on big arrays even if one block would fit.
    while (total_bytes > 2 * _MIB
           and pl.cdiv(B, bB) * pl.cdiv(TC, L) < 4
           and L > unit
           and bB * L * itemsize > 512 * 1024):
        L = max(unit, _round_down(max(L // 2, unit), unit))
    return bB, L


def _3d_tiles(B, T, C, itemsize, budget):
    """(bB, tT) block for the (B, T, C) view (full C in every block)."""
    sub = _sublane(itemsize)
    row = C * itemsize
    if T * row <= budget:
        tT = T
        bB = max(1, min(B, budget // max(1, T * row)))
    else:
        tT = max(sub, _round_down(budget // row, sub))
        bB = 1
    total_bytes = B * T * row
    # Expose a few grid steps on big arrays for pipeline overlap / v7x cores.
    while (total_bytes > 2 * _MIB
           and pl.cdiv(B, bB) * pl.cdiv(T, tT) < 4
           and bB * tT * row > 512 * 1024):
        if bB > 1:
            bB = max(1, bB // 2)
        elif tT > sub:
            tT = max(sub, _round_down(max(tT // 2, sub), sub))
        else:
            break
    return bB, tT


def channel_dropout(x, *, drop_prob=0.1, key=None, training=True, donate_x=False):
    """Pallas ChannelDropout matching the BolT nn.Module forward.  x: (B, T, C)."""
    if x.ndim != 3:
        raise ValueError(f"expected x of shape (B, T, C), got {x.shape}")
    if (not training) or drop_prob == 0.0:
        return x
    if key is None:
        raise ValueError("channel_dropout requires an explicit PRNG `key` when "
                         "training with drop_prob > 0.")

    B, T, C = x.shape
    itemsize = jnp.dtype(x.dtype).itemsize
    # torch.rand(B, C) > drop_prob  ==  keep mask (no 1/(1-p) rescale: matches
    # the BolT module exactly).
    keep = (jax.random.uniform(key, (B, C)) > drop_prob).astype(x.dtype)

    vmem_cap = _vmem_capacity_bytes()
    budget = max(_MIB, vmem_cap // 16)      # per-block target: 4 MiB v7x, 8 MiB v5e/v6e
    io_alias = {0: 0} if donate_x else {}

    # Flatten only when the trailing dim would badly waste lanes (< 50% util);
    # for C >= 128 the 3-D path is already lane-dense enough, stays HBM-bound,
    # and avoids any replicated-mask traffic.
    use_flat = (C % 128 != 0) and (C < 128)

    if use_flat:
        TC = T * C
        bB, L = _flat_tiles(B, TC, C, itemsize, budget)
        x_in = x.reshape(B, TC)                       # free reshape (contiguous)
        mask = jnp.tile(keep, (1, L // C))            # one lane-block of mask: (B, L)
        grid = (pl.cdiv(B, bB), pl.cdiv(TC, L))
        block_bytes = bB * L * itemsize
        footprint = 6 * block_bytes                   # 2x (x, mask, out) buffers
        in_specs = [pl.BlockSpec((bB, L), lambda ib, il: (ib, il)),
                    pl.BlockSpec((bB, L), lambda ib, il: (ib, 0))]   # reused over il
        out_spec = pl.BlockSpec((bB, L), lambda ib, il: (ib, il))
        out_shape = jax.ShapeDtypeStruct((B, TC), x.dtype)
    else:
        bB, tT = _3d_tiles(B, T, C, itemsize, budget)
        x_in = x
        mask = keep[:, None, :]                       # (B, 1, C)
        grid = (pl.cdiv(B, bB), pl.cdiv(T, tT))
        block_bytes = bB * tT * C * itemsize
        footprint = 4 * block_bytes + 2 * bB * C * itemsize
        in_specs = [pl.BlockSpec((bB, tT, C), lambda ib, it: (ib, it, 0)),
                    pl.BlockSpec((bB, 1, C), lambda ib, it: (ib, 0, 0))]
        out_spec = pl.BlockSpec((bB, tT, C), lambda ib, it: (ib, it, 0))
        out_shape = jax.ShapeDtypeStruct((B, T, C), x.dtype)

    vmem_limit = int(min(vmem_cap, max(8 * _MIB, footprint + 4 * _MIB)))

    y = pl.pallas_call(
        _mul_kernel,
        out_shape=out_shape,
        grid=grid,
        in_specs=in_specs,
        out_specs=out_spec,
        input_output_aliases=io_alias,
        compiler_params=pltpu.CompilerParams(
            dimension_semantics=("parallel", "parallel"),
            vmem_limit_bytes=vmem_limit,
        ),
    )(x_in, mask)

    return y.reshape(B, T, C) if use_flat else y


if __name__ == "__main__":
    drop_prob = 0.1
    root = jax.random.PRNGKey(0)
    data_key, drop_key, data_key2, drop_key2 = jax.random.split(root, 4)

    # Shape implied by the module's forward: (batch, time, channels).
    # C=32 exercises the lane-dense flattened path.
    B, T, C = 2, 8, 32
    x = jax.random.normal(data_key, (B, T, C), dtype=jnp.float32)
    y = jax.block_until_ready(channel_dropout(x, drop_prob=drop_prob, key=drop_key))

    keep = (jax.random.uniform(drop_key, (B, C)) > drop_prob).astype(x.dtype)
    expected = x * keep[:, None, :]
    assert y.shape == x.shape and y.dtype == x.dtype
    assert bool(jnp.all(y == expected))
    # Every (b, c) column is either kept verbatim across T or fully zeroed.
    col_kept = jnp.all(y == x, axis=1)
    col_zero = jnp.all(y == 0.0, axis=1)
    assert bool(jnp.all(col_kept | col_zero))

    # C a multiple of 128 exercises the 3-D broadcast path.
    B2, T2, C2 = 2, 16, 128
    x2 = jax.random.normal(data_key2, (B2, T2, C2), dtype=jnp.float32)
    y2 = jax.block_until_ready(channel_dropout(x2, drop_prob=drop_prob, key=drop_key2))
    keep2 = (jax.random.uniform(drop_key2, (B2, C2)) > drop_prob).astype(x2.dtype)
    assert bool(jnp.all(y2 == x2 * keep2[:, None, :]))

    # Eval mode / zero drop probability are identity (no kernel launch).
    assert bool(jnp.all(channel_dropout(x, drop_prob=drop_prob, training=False) == x))
    assert bool(jnp.all(channel_dropout(x, drop_prob=0.0, key=drop_key) == x))

    print("KERNEL_OK")
</pallas_src>

<mosaic_0001>
module attributes {stable_mosaic.version = 11 : i64} {
  func.func @_mul_kernel(%arg0: i32, %arg1: i32, %arg2: memref<2x256xf32, #tpu.memory_space<vmem>>, %arg3: memref<2x256xf32, #tpu.memory_space<vmem>>, %arg4: memref<2x256xf32, #tpu.memory_space<vmem>>) attributes {dimension_semantics = [#tpu.dimension_semantics<parallel>, #tpu.dimension_semantics<parallel>], iteration_bounds = array<i64: 1, 1>, scalar_prefetch = 0 : i64, scratch_operands = 0 : i64, tpu.core_type = #tpu.core_type<tc>, window_params = [{transform_indices = @transform_0, window_bounds = array<i64: 2, 256>}, {transform_indices = @transform_1, window_bounds = array<i64: 2, 256>}, {transform_indices = @transform_2, window_bounds = array<i64: 2, 256>}]} {
    %c0 = arith.constant 0 : index
    %c0_0 = arith.constant 0 : index
    %0 = vector.load %arg2[%c0, %c0_0] : memref<2x256xf32, #tpu.memory_space<vmem>>, vector<2x256xf32>
    %c0_1 = arith.constant 0 : index
    %c0_2 = arith.constant 0 : index
    %1 = vector.load %arg3[%c0_1, %c0_2] : memref<2x256xf32, #tpu.memory_space<vmem>>, vector<2x256xf32>
    %2 = arith.mulf %0, %1 : vector<2x256xf32>
    %c0_3 = arith.constant 0 : index
    %c0_4 = arith.constant 0 : index
    %3 = vector.load %arg4[%c0_3, %c0_4] : memref<2x256xf32, #tpu.memory_space<vmem>>, vector<2x256xf32>
    tpu.vector_store %arg4[%c0_3, %c0_4], %2 {strides = array<i32>} : memref<2x256xf32, #tpu.memory_space<vmem>>, vector<2x256xf32>,
    return
  }
  func.func @transform_0(%arg0: i32, %arg1: i32) -> (i32, i32) {
    %c0_i32 = arith.constant 0 : i32
    return %arg0, %arg1 : i32, i32
  }
  func.func @transform_1(%arg0: i32, %arg1: i32) -> (i32, i32) {
    %c0_i32 = arith.constant 0 : i32
    %c0_i32_0 = arith.constant 0 : i32
    return %arg0, %c0_i32 : i32, i32
  }
  func.func @transform_2(%arg0: i32, %arg1: i32) -> (i32, i32) {
    %c0_i32 = arith.constant 0 : i32
    return %arg0, %arg1 : i32, i32
  }
}

</mosaic_0001>

<llo_original>
// kernel: tpu_custom_call.1
$region0: #{tpu_custom_call.1}
  #allocation0 [shape = 'u32[]', space=smem, size = 0x4, offset = 0x4, fixed_abs, tag = 'smem constant byte address 0x4 - core index']
  #allocation1 [shape = 'u32[144,128]{1,0:T(1,128)}', space=vmem, size = 0x12000, scoped, tag = 'internal scratch']
  %s0 = inlined_call_operand.hbm [shape: f32[2,256], index: 0, kind: input, shape index: {}]
  %s1 = inlined_call_operand.hbm [shape: f32[2,256], index: 1, kind: input, shape index: {}]
  %s2 = inlined_call_operand.hbm [shape: f32[2,256], index: 2, kind: output, shape index: {}]
  %s3 = sld [smem:[#allocation0]]
  $region26: #{tpu_custom_call.1} parent=0
    _
  %s5 = ssub.s32 1, %s3
  %s6 = scalar_select 0, %s5, %s3
  $region1: #{tpu_custom_call.1} parent=0
    #allocation2 [shape = 'u8[2048]{0}', space=vmem, size = 0x800, scoped, tag = 'input window, operand 0, single buffered']
    #allocation3 [shape = 's32[1]{0}', space=sflag, size = 0x4, scoped, tag = 'scoped memory for tpu_custom_call.1']
    #allocation4 [shape = 's32[1]{0}', space=sflag, size = 0x4, scoped, tag = 'scoped memory for tpu_custom_call.1']
    #allocation5 [shape = 'u8[2048]{0}', space=vmem, size = 0x800, scoped, tag = 'input window, operand 1, single buffered']
    #allocation6 [shape = 's32[1]{0}', space=sflag, size = 0x4, scoped, tag = 'scoped memory for tpu_custom_call.1']
    #allocation7 [shape = 'u8[2048]{0}', space=vmem, size = 0x800, scoped, tag = 'output window, operand 0, single buffered']
    %7 = vsyncpa [#allocation3], 0
    %8 = vsyncpa [#allocation6], 0
    %9 = vsyncpa [#allocation4], 0
    // Predicated region
    $region2: #{tpu_custom_call.1} parent=1 // pred_check
      _
    $region3: #{tpu_custom_call.1} parent=1 // pred_check_branch
      %11 = sbr.rel (0) target = $region5
    $region4: #{tpu_custom_call.1} parent=1 // pred_region
      %s13 = ssub.s32 64, 64
      %14 = vsyncadd [#allocation3], %s13
      %s16 = sshll.u32 [#allocation2], 4
      %s17 = int_to_ptr.vmem [resolvable:$true] %s16
      %19 = dma.hbm_to_vmem [thread:$0]  %s0, 64, %s17, [#allocation3]
    $region5: #{tpu_custom_call.1} parent=1 // pred_fallthru
      _
    // Predicated region
    $region6: #{tpu_custom_call.1} parent=1 // pred_check
      _
    $region7: #{tpu_custom_call.1} parent=1 // pred_check_branch
      %21 = sbr.rel (0) target = $region9
    $region8: #{tpu_custom_call.1} parent=1 // pred_region
      %s23 = ssub.s32 64, 64
      %24 = vsyncadd [#allocation6], %s23
      %s26 = sshll.u32 [#allocation5], 4
      %s27 = int_to_ptr.vmem [resolvable:$true] %s26
      %29 = dma.hbm_to_vmem [thread:$0]  %s1, 64, %s27, [#allocation6]
    $region9: #{tpu_custom_call.1} parent=1 // pred_fallthru
      _
    // Predicated region
    $region10: #{tpu_custom_call.1} parent=1 // pred_check
      _
    $region11: #{tpu_custom_call.1} parent=1 // pred_check_branch
      %31 = sbr.rel (0) target = $region13
    $region12: #{tpu_custom_call.1} parent=1 // pred_region
      %32 = dma.done [#allocation3], 64
    $region13: #{tpu_custom_call.1} parent=1 // pred_fallthru
      _
    // Predicated region
    $region14: #{tpu_custom_call.1} parent=1 // pred_check
      _
    $region15: #{tpu_custom_call.1} parent=1 // pred_check_branch
      %34 = sbr.rel (0) target = $region17
    $region16: #{tpu_custom_call.1} parent=1 // pred_region
      %35 = dma.done [#allocation6], 64
    $region17: #{tpu_custom_call.1} parent=1 // pred_fallthru
      _
    %v36 = vld [vmem:[#allocation2] sm:$0xf]
    %v37 = vld [vmem:[#allocation5] sm:$0xf]
    %v38 = vmul.f32 %v36, %v37
    %39 = vst [vmem:[#allocation7] sm:$0xf] %v38
    // Predicated region
    $region18: #{tpu_custom_call.1} parent=1 // pred_check
      _
    $region19: #{tpu_custom_call.1} parent=1 // pred_check_branch
      %41 = sbr.rel (0) target = $region21
    $region20: #{tpu_custom_call.1} parent=1 // pred_region
      %s43 = ssub.s32 64, 64
      %44 = vsyncadd [#allocation4], %s43
      %s46 = sshll.u32 [#allocation7], 4
      %s47 = int_to_ptr.vmem [resolvable:$true] %s46
      %49 = dma.vmem_to_hbm [thread:$0]  %s47, 64, %s2, [#allocation4]
    $region21: #{tpu_custom_call.1} parent=1 // pred_fallthru
      _
    // Predicated region
    $region22: #{tpu_custom_call.1} parent=1 // pred_check
      _
    $region23: #{tpu_custom_call.1} parent=1 // pred_check_branch
      %51 = sbr.rel (0) target = $region25
    $region24: #{tpu_custom_call.1} parent=1 // pred_region
      %52 = dma.done [#allocation4], 64
    $region25: #{tpu_custom_call.1} parent=1 // pred_fallthru
      _
    %53 = vsyncpa [#allocation3], 1
    %54 = vsyncpa [#allocation6], 1
    %55 = vsyncpa [#allocation4], 1

</llo_original>
